<compile_context>
chip_gen: v6e
topology: v6e:2x2x1
jax: 0.10.0
libtpu: 0.0.40
codegen_flags: <defaults>
</compile_context>

<pallas_src>
import jax
import jax.numpy as jnp
import numpy as np
from jax import lax
from jax.experimental import pallas as pl
from jax.experimental.pallas import tpu as pltpu

B, C, L = 16, 4, 100        # matches the X fixture: random_one_hot((16, 4, 100))
K = C * L                   # 400 flattened features
N_OUT = 3                   # toy model produces 3 outputs; LambdaWrapper keeps col 0

TILE_B = 512                # >=512-row tiles reach ~85% of HBM roofline; ~0.4-0.8 MiB/buffer


def _round_up(n, m):
    return ((n + m - 1) // m) * m


def _lambda_dense_kernel(x_ref, w_ref, b_ref, o_ref):
    # x: (TILE_B, K) in caller dtype (bf16/f32 one-hot)  -> upcast to f32 in VMEM
    # w: (1, K) f32 column-0 weight row (resident)       b: SMEM f32[1] scalar
    x = x_ref[...].astype(jnp.float32)
    # w @ x.T on the MXU -> (1, TILE_B): lane-dense row, single unmasked store.
    s = lax.dot_general(
        w_ref[...], x,
        dimension_numbers=(((1,), (1,)), ((), ())),      # contract K with K (NT matmul)
        precision=lax.Precision.HIGHEST,                 # exact f32; compute is hidden anyway
        preferred_element_type=jnp.float32,
    )
    o_ref[...] = s + b_ref[0]


def make_lambda_wrapper_forward(W, b):
    """Build forward(X) == LambdaWrapper(FlattenDense(W, b), lambda m, x: m(x)[:, 0:1])(X).

    All parameter prep (column slice / transpose / dtype) happens once here.
    X may carry arbitrary leading batch dims (e.g. references x examples) and
    may be bf16 one-hot; all rows are evaluated in a single pallas_call.
    """
    k_feat = W.shape[0]
    w_col = jnp.asarray(W[:, 0:1].T, jnp.float32)        # (1, K): lambda folded into params
    b_col = jnp.asarray(b[0:1], jnp.float32)             # (1,)  : SMEM scalar

    @jax.jit
    def forward(X):
        lead = X.shape[:-2]
        assert X.shape[-2] * X.shape[-1] == k_feat, "trailing dims must flatten to K"
        b_total = 1
        for d in lead:
            b_total *= d
        x = X.reshape(b_total, k_feat)                   # row-major flatten == torch .flatten

        # Tile the (possibly huge) DeepLIFT-SHAP batch; pad rows to a tile multiple.
        tile_b = TILE_B if b_total >= TILE_B else _round_up(max(b_total, 1), 8)
        b_pad = _round_up(b_total, tile_b)
        if b_pad != b_total:
            x = jnp.pad(x, ((0, b_pad - b_total), (0, 0)))

        out_row = pl.pallas_call(
            _lambda_dense_kernel,
            out_shape=jax.ShapeDtypeStruct((1, b_pad), jnp.float32),
            grid=(b_pad // tile_b,),
            in_specs=[
                pl.BlockSpec((tile_b, k_feat), lambda i: (i, 0)),    # x tile (pipelined)
                pl.BlockSpec((1, k_feat), lambda i: (0, 0)),         # w row (resident, 1.6 KB)
                pl.BlockSpec(memory_space=pltpu.MemorySpace.SMEM),   # bias scalar
            ],
            out_specs=pl.BlockSpec((1, tile_b), lambda i: (0, i)),   # lane-dense output row
            compiler_params=pltpu.CompilerParams(
                dimension_semantics=("parallel",),                   # shard tiles across TCs (v7x)
            ),
        )(x, w_col, b_col)

        # Free layout plumbing back to the module's (..., 1) output.
        out = out_row.reshape(b_pad, 1)[:b_total]
        return out.reshape(lead + (1,))

    return forward


def _make_X(key):
    """Deterministic stand-in for random_one_hot((16,4,100)) + substitute('ACGTACGT')."""
    idx = jax.random.randint(key, (B, L), 0, C)                      # random categories
    X = jax.nn.one_hot(idx, C, axis=1, dtype=jnp.float32)            # (B, C, L)
    motif = jnp.array([0, 1, 2, 3, 0, 1, 2, 3], dtype=jnp.int32)     # A C G T A C G T
    start = (L - motif.shape[0]) // 2
    motif_oh = jax.nn.one_hot(motif, C, axis=0, dtype=jnp.float32)   # (C, 8)
    X = X.at[:, :, start:start + motif.shape[0]].set(motif_oh[None])
    return X


if __name__ == "__main__":
    key = jax.random.PRNGKey(0)
    kx, kw, kb, kp = jax.random.split(key, 4)

    X = _make_X(kx)                                              # (16, 4, 100) one-hot f32 fixture
    W = jax.random.normal(kw, (K, N_OUT), jnp.float32) * 0.05    # Linear(400, 3) weight
    b = jax.random.normal(kb, (N_OUT,), jnp.float32) * 0.01      # Linear(400, 3) bias

    forward = make_lambda_wrapper_forward(W, b)                  # params prepped once

    W64, b64 = np.asarray(W, np.float64), np.asarray(b, np.float64)

    # (a) canonical LambdaWrapper forward on the 16-example fixture batch.
    out = jax.block_until_ready(forward(X))
    ref = (np.asarray(X, np.float64).reshape(B, K) @ W64 + b64)[:, 0:1]
    np.testing.assert_allclose(np.asarray(out), ref, rtol=1e-5, atol=1e-5)
    assert out.shape == (B, 1) and out.dtype == jnp.float32

    # (b) batched DeepLIFT-SHAP style evaluation: 64 references x 16 examples
    #     = 1024 rows folded into ONE pallas_call (two 512-row "parallel" tiles),
    #     with the one-hot input shipped as bf16 (exact) to halve HBM traffic.
    n_refs = 64
    idx = jax.random.randint(kp, (n_refs, B, L), 0, C)
    Xb = jax.nn.one_hot(idx, C, axis=2, dtype=jnp.bfloat16)      # (64, 16, 4, 100) bf16
    out_b = jax.block_until_ready(forward(Xb))                   # (64, 16, 1) f32
    Xb64 = np.asarray(Xb.astype(jnp.float32), np.float64).reshape(n_refs * B, K)
    ref_b = (Xb64 @ W64 + b64)[:, 0:1]
    np.testing.assert_allclose(
        np.asarray(out_b).reshape(n_refs * B, 1), ref_b, rtol=1e-5, atol=1e-5)
    assert out_b.shape == (n_refs, B, 1) and out_b.dtype == jnp.float32

    print("KERNEL_OK")
</pallas_src>

<mosaic_0001>
module attributes {stable_mosaic.version = 11 : i64} {
  func.func @_lambda_dense_kernel(%arg0: i32, %arg1: memref<16x400xf32, #tpu.memory_space<vmem>>, %arg2: memref<1x400xf32, #tpu.memory_space<vmem>>, %arg3: memref<1xf32, #tpu.memory_space<smem>>, %arg4: memref<1x16xf32, #tpu.memory_space<vmem>>) attributes {dimension_semantics = [#tpu.dimension_semantics<parallel>], iteration_bounds = array<i64: 1>, scalar_prefetch = 0 : i64, scratch_operands = 0 : i64, tpu.core_type = #tpu.core_type<tc>, window_params = [{transform_indices = @transform_0, window_bounds = array<i64: 16, 400>}, {pipeline_mode = #tpu.pipeline_mode<synchronous>, transform_indices = @transform_1, window_bounds = array<i64: 1, 400>}, {transform_indices = @transform_2, window_bounds = array<i64: 1>}, {transform_indices = @transform_3, window_bounds = array<i64: 1, 16>}]} {
    %c0 = arith.constant 0 : index
    %c0_0 = arith.constant 0 : index
    %0 = vector.load %arg1[%c0, %c0_0] : memref<16x400xf32, #tpu.memory_space<vmem>>, vector<16x400xf32>
    %c0_1 = arith.constant 0 : index
    %c0_2 = arith.constant 0 : index
    %1 = vector.load %arg2[%c0_1, %c0_2] : memref<1x400xf32, #tpu.memory_space<vmem>>, vector<1x400xf32>
    %cst = arith.constant dense<0.000000e+00> : vector<1x16xf32>
    %2 = tpu.matmul %1, %0, %cst {dimension_numbers = #tpu.dot_dimension_numbers<[1], [1], [0], [0], [0, 0, 1, 0], [], []>, precision = #tpu.contract_precision<fp32>} : vector<1x400xf32>, vector<16x400xf32>, vector<1x16xf32> -> vector<1x16xf32>
    %c0_3 = arith.constant 0 : index
    %3 = memref.load %arg3[%c0_3] : memref<1xf32, #tpu.memory_space<smem>>
    %4 = vector.broadcast %3 : f32 to vector<1x16xf32>
    %5 = arith.addf %2, %4 : vector<1x16xf32>
    %c0_4 = arith.constant 0 : index
    %c0_5 = arith.constant 0 : index
    %6 = vector.load %arg4[%c0_4, %c0_5] : memref<1x16xf32, #tpu.memory_space<vmem>>, vector<1x16xf32>
    tpu.vector_store %arg4[%c0_4, %c0_5], %5 {strides = array<i32>} : memref<1x16xf32, #tpu.memory_space<vmem>>, vector<1x16xf32>,
    return
  }
  func.func @transform_0(%arg0: i32) -> (i32, i32) {
    %c0_i32 = arith.constant 0 : i32
    %c0_i32_0 = arith.constant 0 : i32
    return %arg0, %c0_i32 : i32, i32
  }
  func.func @transform_1(%arg0: i32) -> (i32, i32) {
    %c0_i32 = arith.constant 0 : i32
    %c0_i32_0 = arith.constant 0 : i32
    %c0_i32_1 = arith.constant 0 : i32
    return %c0_i32, %c0_i32_0 : i32, i32
  }
  func.func @transform_2(%arg0: i32) -> i32 {
    %c0_i32 = arith.constant 0 : i32
    %c0_i32_0 = arith.constant 0 : i32
    return %c0_i32 : i32
  }
  func.func @transform_3(%arg0: i32) -> (i32, i32) {
    %c0_i32 = arith.constant 0 : i32
    %c0_i32_0 = arith.constant 0 : i32
    return %c0_i32, %arg0 : i32, i32
  }
}

</mosaic_0001>

<llo_original>
// kernel: forward.1
$region0: #{forward.1}
  #allocation0 [shape = 'u32[]', space=smem, size = 0x4, offset = 0x4, fixed_abs, tag = 'smem constant byte address 0x4 - core index']
  #allocation1 [shape = 'u32[144,128]{1,0:T(1,128)}', space=vmem, size = 0x12000, scoped, tag = 'internal scratch']
  #allocation2 [shape = 'f32[1]{0:T(128)S(6)}', space=smem, size = 0x200, scoped, tag = 'scoped memory for forward.1']
  %s0 = inlined_call_operand.vmem [shape: f32[16,400], index: 0, kind: input, shape index: {}]
  %s1 = inlined_call_operand.vmem [shape: f32[1,400], index: 1, kind: input, shape index: {}]
  %s2 = inlined_call_operand.<no memory space> [shape: f32[1], index: 2, kind: input, shape index: {}]
  %s3 = inlined_call_operand.hbm [shape: f32[1,16], index: 3, kind: output, shape index: {}]
  %s4 = sld [smem:[#allocation0]]
  $region22: #{forward.1} parent=0
    _
  %s6 = ssub.s32 1, %s4
  %s7 = scalar_select 0, %s6, %s4
  %8 = sst [smem:[#allocation2]] %s2
  $region1: #{forward.1} parent=0
    #allocation3 [shape = 'u8[512]{0}', space=vmem, size = 0x400, scoped, tag = 'output window, operand 0, single buffered']
    #allocation4 [shape = 's32[1]{0}', space=sflag, size = 0x4, scoped, tag = 'scoped memory for forward.1']
    %9 = vsyncpa [#allocation4], 0
    // Predicated region
    $region2: #{forward.1} parent=1 // pred_check
      _
    $region3: #{forward.1} parent=1 // pred_check_branch
      %11 = sbr.rel (0) target = $region5
    $region4: #{forward.1} parent=1 // pred_region
      _
    $region5: #{forward.1} parent=1 // pred_fallthru
      _
    // Predicated region
    $region6: #{forward.1} parent=1 // pred_check
      _
    $region7: #{forward.1} parent=1 // pred_check_branch
      %13 = sbr.rel (0) target = $region9
    $region8: #{forward.1} parent=1 // pred_region
      _
    $region9: #{forward.1} parent=1 // pred_fallthru
      _
    // Predicated region
    $region10: #{forward.1} parent=1 // pred_check
      _
    $region11: #{forward.1} parent=1 // pred_check_branch
      %15 = sbr.rel (0) target = $region13
    $region12: #{forward.1} parent=1 // pred_region
      _
    $region13: #{forward.1} parent=1 // pred_fallthru
      _
    %v16 = vld [vmem:[%s0] sm:$0xff]
    %v17 = vld [vmem:[%s0 + $0x8] sm:$0xff]
    %v18 = vld [vmem:[%s0 + $0x10] sm:$0xff]
    %v19 = vld [vmem:[%s0 + $0x18] sm:$0xff]
    %v20 = vld [vmem:[%s0 + $0x20] sm:$0xff]
    %v21 = vld [vmem:[%s0 + $0x28] sm:$0xff]
    %v22 = vld [vmem:[%s0 + $0x30] sm:$0xff]
    %v23 = vld [vmem:[%s0 + $0x38] sm:$0xff]
    %v24 = vld [vmem:[%s1] sm:$0xf]
    %s25 = sld [smem:[#allocation2]]
    %v26 = vstv %s25
    %v28 = vlaneseq
    %v29 = vshrl.u32 %v28, 7
    %v30 = vsub.s32 0, %v29
    %v31 = vrot.slane %v24, %v30
    %v32 = vlaneseq
    %v33 = vshrl.u32 %v32, 7
    %v34 = vsub.s32 1, %v33
    %v35 = vrot.slane %v24, %v34
    %v36 = vlaneseq
    %v37 = vshrl.u32 %v36, 7
    %v38 = vsub.s32 2, %v37
    %v39 = vrot.slane %v24, %v38
    %v40 = vlaneseq
    %v41 = vshrl.u32 %v40, 7
    %v42 = vsub.s32 3, %v41
    %v43 = vrot.slane %v24, %v42
    %vm47 = vcmask 130048
    %v48 = vsel %vm47, %v43, 0
    %v51 = vsel %vm47, %v19, 0
    %v54 = vsel %vm47, %v23, 0
    %56 = vmatprep.subr.mxu0 0.0
    %57 = vmatpush1.xpose.msra.mxu0 0.0
    %58 = vmatprep.subr.mxu0 0.0
    %59 = vmatpush1.xpose.msra.mxu0 0.0
    %60 = vmatprep.subr.mxu0 0.0
    %61 = vmatpush1.xpose.msra.mxu0 0.0
    %62 = vmatprep.subr.mxu0 0.0
    %63 = vmatpush1.xpose.msra.mxu0 0.0
    %64 = vmatprep.subr.mxu0 0.0
    %65 = vmatpush1.xpose.msra.mxu0 0.0
    %66 = vmatprep.subr.mxu0 0.0
    %67 = vmatpush1.xpose.msra.mxu0 0.0
    %68 = vmatprep.subr.mxu0 0.0
    %69 = vmatpush1.xpose.msra.mxu0 0.0
    %70 = vmatprep.subr.mxu0 0.0
    %71 = vmatpush1.xpose.msra.mxu0 0.0
    %72 = vmatprep.subr.mxu0 0.0
    %73 = vmatpush1.xpose.msra.mxu0 0.0
    %74 = vmatprep.subr.mxu0 0.0
    %75 = vmatpush1.xpose.msra.mxu0 0.0
    %76 = vmatprep.subr.mxu0 0.0
    %77 = vmatpush1.xpose.msra.mxu0 0.0
    %78 = vmatprep.subr.mxu0 0.0
    %79 = vmatpush1.xpose.msra.mxu0 0.0
    %80 = vmatprep.subr.mxu0 0.0
    %81 = vmatpush1.xpose.msra.mxu0 0.0
    %82 = vmatprep.subr.mxu0 0.0
    %83 = vmatpush1.xpose.msra.mxu0 0.0
    %v84 = vand.u32 %v21, 4294901760
    %85 = vmatprep.subr.mxu0 %v84
    %v86 = vand.u32 %v20, 4294901760
    %87 = vmatpush1.xpose.msra.mxu0 %v86
    %v88 = vand.u32 %v17, 4294901760
    %89 = vmatprep.subr.mxu0 %v88
    %v90 = vand.u32 %v16, 4294901760
    %91 = vmatpush1.xpose.msra.mxu0 %v90
    %92 = vmatprep.subr.mxu0 0.0
    %93 = vmatpush2.xpose.msra.mxu0 0.0
    %94 = vmatprep.subr.mxu0 0.0
    %95 = vmatpush2.xpose.msra.mxu0 0.0
    %96 = vmatprep.subr.mxu0 0.0
    %97 = vmatpush2.xpose.msra.mxu0 0.0
    %98 = vmatprep.subr.mxu0 0.0
    %99 = vmatpush2.xpose.msra.mxu0 0.0
    %100 = vmatprep.subr.mxu0 0.0
    %101 = vmatpush2.xpose.msra.mxu0 0.0
    %102 = vmatprep.subr.mxu0 0.0
    %103 = vmatpush2.xpose.msra.mxu0 0.0
    %104 = vmatprep.subr.mxu0 0.0
    %105 = vmatpush2.xpose.msra.mxu0 0.0
    %106 = vmatprep.subr.mxu0 0.0
    %107 = vmatpush2.xpose.msra.mxu0 0.0
    %108 = vmatprep.subr.mxu0 0.0
    %109 = vmatpush2.xpose.msra.mxu0 0.0
    %110 = vmatprep.subr.mxu0 0.0
    %111 = vmatpush2.xpose.msra.mxu0 0.0
    %112 = vmatprep.subr.mxu0 0.0
    %113 = vmatpush2.xpose.msra.mxu0 0.0
    %114 = vmatprep.subr.mxu0 0.0
    %115 = vmatpush2.xpose.msra.mxu0 0.0
    %116 = vmatprep.subr.mxu0 0.0
    %117 = vmatpush2.xpose.msra.mxu0 0.0
    %118 = vmatprep.subr.mxu0 0.0
    %119 = vmatpush2.xpose.msra.mxu0 0.0
    %120 = vmatprep.subr.mxu0 0.0
    %121 = vmatpush2.xpose.msra.mxu0 0.0
    %122 = vmatprep.subr.mxu0 0.0
    %123 = vmatpush2.xpose.msra.mxu0 0.0
    %v124 = vand.u32 %v35, 4294901760
    %v125 = vsub.f32 %v35, %v124
    %v126 = vand.u32 %v125, 4294901760
    %v127 = vsub.f32 %v125, %v126
    %v128 = vand.u32 %v127, 4294901760
    %129 = vmatprep.mubr.f32.mxu0 %v128
    %v130 = vand.u32 %v31, 4294901760
    %v131 = vsub.f32 %v31, %v130
    %v132 = vand.u32 %v131, 4294901760
    %v133 = vsub.f32 %v131, %v132
    %v134 = vand.u32 %v133, 4294901760
    %135 = vmatmul.mubr.f32.gmra.mxu0 %v134
    %v136 = vpop.f32.mrf.mxu0
    %v137 = vadd.f32 %v26, %v136
    %v138 = vpop.f32.mrf.mxu0
    %139 = vdwg.mxu0
    %140 = vmatprep.subr.mxu0 0.0
    %141 = vmatpush1.xpose.msra.mxu0 0.0
    %142 = vmatprep.subr.mxu0 0.0
    %143 = vmatpush1.xpose.msra.mxu0 0.0
    %144 = vmatprep.subr.mxu0 0.0
    %145 = vmatpush1.xpose.msra.mxu0 0.0
    %146 = vmatprep.subr.mxu0 0.0
    %147 = vmatpush1.xpose.msra.mxu0 0.0
    %148 = vmatprep.subr.mxu0 0.0
    %149 = vmatpush1.xpose.msra.mxu0 0.0
    %150 = vmatprep.subr.mxu0 0.0
    %151 = vmatpush1.xpose.msra.mxu0 0.0
    %152 = vmatprep.subr.mxu0 0.0
    %153 = vmatpush1.xpose.msra.mxu0 0.0
    %154 = vmatprep.subr.mxu0 0.0
    %155 = vmatpush1.xpose.msra.mxu0 0.0
    %156 = vmatprep.subr.mxu0 0.0
    %157 = vmatpush1.xpose.msra.mxu0 0.0
    %158 = vmatprep.subr.mxu0 0.0
    %159 = vmatpush1.xpose.msra.mxu0 0.0
    %160 = vmatprep.subr.mxu0 0.0
    %161 = vmatpush1.xpose.msra.mxu0 0.0
    %162 = vmatprep.subr.mxu0 0.0
    %163 = vmatpush1.xpose.msra.mxu0 0.0
    %164 = vmatprep.subr.mxu0 0.0
    %165 = vmatpush1.xpose.msra.mxu0 0.0
    %166 = vmatprep.subr.mxu0 0.0
    %167 = vmatpush1.xpose.msra.mxu0 0.0
    %v168 = vand.u32 %v21, 4294901760
    %v169 = vsub.f32 %v21, %v168
    %v170 = vand.u32 %v169, 4294901760
    %v171 = vsub.f32 %v169, %v170
    %v172 = vand.u32 %v171, 4294901760
    %173 = vmatprep.subr.mxu0 %v172
    %v174 = vand.u32 %v20, 4294901760
    %v175 = vsub.f32 %v20, %v174
    %v176 = vand.u32 %v175, 4294901760
    %v177 = vsub.f32 %v175, %v176
    %v178 = vand.u32 %v177, 4294901760
    %179 = vmatpush1.xpose.msra.mxu0 %v178
    %v180 = vand.u32 %v17, 4294901760
    %v181 = vsub.f32 %v17, %v180
    %v182 = vand.u32 %v181, 4294901760
    %v183 = vsub.f32 %v181, %v182
    %v184 = vand.u32 %v183, 4294901760
    %185 = vmatprep.subr.mxu0 %v184
    %v186 = vand.u32 %v16, 4294901760
    %v187 = vsub.f32 %v16, %v186
    %v188 = vand.u32 %v187, 4294901760
    %v189 = vsub.f32 %v187, %v188
    %v190 = vand.u32 %v189, 4294901760
    %191 = vmatpush1.xpose.msra.mxu0 %v190
    %192 = vmatprep.subr.mxu0 0.0
    %193 = vmatpush2.xpose.msra.mxu0 0.0
    %194 = vmatprep.subr.mxu0 0.0
    %195 = vmatpush2.xpose.msra.mxu0 0.0
    %196 = vmatprep.subr.mxu0 0.0
    %197 = vmatpush2.xpose.msra.mxu0 0.0
    %198 = vmatprep.subr.mxu0 0.0
    %199 = vmatpush2.xpose.msra.mxu0 0.0
    %200 = vmatprep.subr.mxu0 0.0
    %201 = vmatpush2.xpose.msra.mxu0 0.0
    %202 = vmatprep.subr.mxu0 0.0
    %203 = vmatpush2.xpose.msra.mxu0 0.0
    %204 = vmatprep.subr.mxu0 0.0
    %205 = vmatpush2.xpose.msra.mxu0 0.0
    %206 = vmatprep.subr.mxu0 0.0
    %207 = vmatpush2.xpose.msra.mxu0 0.0
    %208 = vmatprep.subr.mxu0 0.0
    %209 = vmatpush2.xpose.msra.mxu0 0.0
    %210 = vmatprep.subr.mxu0 0.0
    %211 = vmatpush2.xpose.msra.mxu0 0.0
    %212 = vmatprep.subr.mxu0 0.0
    %213 = vmatpush2.xpose.msra.mxu0 0.0
    %214 = vmatprep.subr.mxu0 0.0
    %215 = vmatpush2.xpose.msra.mxu0 0.0
    %216 = vmatprep.subr.mxu0 0.0
    %217 = vmatpush2.xpose.msra.mxu0 0.0
    %218 = vmatprep.subr.mxu0 0.0
    %219 = vmatpush2.xpose.msra.mxu0 0.0
    %220 = vmatprep.subr.mxu0 0.0
    %221 = vmatpush2.xpose.msra.mxu0 0.0
    %222 = vmatprep.subr.mxu0 0.0
    %223 = vmatpush2.xpose.msra.mxu0 0.0
    %v224 = vand.u32 %v35, 4294901760
    %225 = vmatprep.mubr.f32.mxu0 %v224
    %v226 = vand.u32 %v31, 4294901760
    %227 = vmatmul.mubr.f32.gmra.mxu0 %v226
    %v228 = vpop.f32.mrf.mxu0
    %v229 = vadd.f32 %v137, %v228
    %v230 = vpop.f32.mrf.mxu0
    %231 = vdwg.mxu0
    %232 = vmatprep.subr.mxu0 0.0
    %233 = vmatpush1.xpose.msra.mxu0 0.0
    %234 = vmatprep.subr.mxu0 0.0
    %235 = vmatpush1.xpose.msra.mxu0 0.0
    %236 = vmatprep.subr.mxu0 0.0
    %237 = vmatpush1.xpose.msra.mxu0 0.0
    %238 = vmatprep.subr.mxu0 0.0
    %239 = vmatpush1.xpose.msra.mxu0 0.0
    %240 = vmatprep.subr.mxu0 0.0
    %241 = vmatpush1.xpose.msra.mxu0 0.0
    %242 = vmatprep.subr.mxu0 0.0
    %243 = vmatpush1.xpose.msra.mxu0 0.0
    %244 = vmatprep.subr.mxu0 0.0
    %245 = vmatpush1.xpose.msra.mxu0 0.0
    %246 = vmatprep.subr.mxu0 0.0
    %247 = vmatpush1.xpose.msra.mxu0 0.0
    %248 = vmatprep.subr.mxu0 0.0
    %249 = vmatpush1.xpose.msra.mxu0 0.0
    %250 = vmatprep.subr.mxu0 0.0
    %251 = vmatpush1.xpose.msra.mxu0 0.0
    %252 = vmatprep.subr.mxu0 0.0
    %253 = vmatpush1.xpose.msra.mxu0 0.0
    %254 = vmatprep.subr.mxu0 0.0
    %255 = vmatpush1.xpose.msra.mxu0 0.0
    %256 = vmatprep.subr.mxu0 0.0
    %257 = vmatpush1.xpose.msra.mxu0 0.0
    %258 = vmatprep.subr.mxu0 0.0
    %259 = vmatpush1.xpose.msra.mxu0 0.0
    %v260 = vand.u32 %v21, 4294901760
    %v261 = vsub.f32 %v21, %v260
    %262 = vmatprep.subr.mxu0 %v261
    %v263 = vand.u32 %v20, 4294901760
    %v264 = vsub.f32 %v20, %v263
    %265 = vmatpush1.xpose.msra.mxu0 %v264
    %v266 = vand.u32 %v17, 4294901760
    %v267 = vsub.f32 %v17, %v266
    %268 = vmatprep.subr.mxu0 %v267
    %v269 = vand.u32 %v16, 4294901760
    %v270 = vsub.f32 %v16, %v269
    %271 = vmatpush1.xpose.msra.mxu0 %v270
    %272 = vmatprep.subr.mxu0 0.0
    %273 = vmatpush2.xpose.msra.mxu0 0.0
    %274 = vmatprep.subr.mxu0 0.0
    %275 = vmatpush2.xpose.msra.mxu0 0.0
    %276 = vmatprep.subr.mxu0 0.0
    %277 = vmatpush2.xpose.msra.mxu0 0.0
    %278 = vmatprep.subr.mxu0 0.0
    %279 = vmatpush2.xpose.msra.mxu0 0.0
    %280 = vmatprep.subr.mxu0 0.0
    %281 = vmatpush2.xpose.msra.mxu0 0.0
    %282 = vmatprep.subr.mxu0 0.0
    %283 = vmatpush2.xpose.msra.mxu0 0.0
    %284 = vmatprep.subr.mxu0 0.0
    %285 = vmatpush2.xpose.msra.mxu0 0.0
    %286 = vmatprep.subr.mxu0 0.0
    %287 = vmatpush2.xpose.msra.mxu0 0.0
    %288 = vmatprep.subr.mxu0 0.0
    %289 = vmatpush2.xpose.msra.mxu0 0.0
    %290 = vmatprep.subr.mxu0 0.0
    %291 = vmatpush2.xpose.msra.mxu0 0.0
    %292 = vmatprep.subr.mxu0 0.0
    %293 = vmatpush2.xpose.msra.mxu0 0.0
    %294 = vmatprep.subr.mxu0 0.0
    %295 = vmatpush2.xpose.msra.mxu0 0.0
    %296 = vmatprep.subr.mxu0 0.0
    %297 = vmatpush2.xpose.msra.mxu0 0.0
    %298 = vmatprep.subr.mxu0 0.0
    %299 = vmatpush2.xpose.msra.mxu0 0.0
    %300 = vmatprep.subr.mxu0 0.0
    %301 = vmatpush2.xpose.msra.mxu0 0.0
    %302 = vmatprep.subr.mxu0 0.0
    %303 = vmatpush2.xpose.msra.mxu0 0.0
    %v304 = vand.u32 %v35, 4294901760
    %v305 = vsub.f32 %v35, %v304
    %306 = vmatprep.mubr.f32.mxu0 %v305
    %v307 = vand.u32 %v31, 4294901760
    %v308 = vsub.f32 %v31, %v307
    %309 = vmatmul.mubr.f32.gmra.mxu0 %v308
    %v310 = vpop.f32.mrf.mxu0
    %v311 = vadd.f32 %v229, %v310
    %v312 = vpop.f32.mrf.mxu0
    %313 = vdwg.mxu0
    %314 = vmatprep.subr.mxu0 0.0
    %315 = vmatpush1.xpose.msra.mxu0 0.0
    %316 = vmatprep.subr.mxu0 0.0
    %317 = vmatpush1.xpose.msra.mxu0 0.0
    %318 = vmatprep.subr.mxu0 0.0
    %319 = vmatpush1.xpose.msra.mxu0 0.0
    %320 = vmatprep.subr.mxu0 0.0
    %321 = vmatpush1.xpose.msra.mxu0 0.0
    %322 = vmatprep.subr.mxu0 0.0
    %323 = vmatpush1.xpose.msra.mxu0 0.0
    %324 = vmatprep.subr.mxu0 0.0
    %325 = vmatpush1.xpose.msra.mxu0 0.0
    %326 = vmatprep.subr.mxu0 0.0
    %327 = vmatpush1.xpose.msra.mxu0 0.0
    %328 = vmatprep.subr.mxu0 0.0
    %329 = vmatpush1.xpose.msra.mxu0 0.0
    %330 = vmatprep.subr.mxu0 0.0
    %331 = vmatpush1.xpose.msra.mxu0 0.0
    %332 = vmatprep.subr.mxu0 0.0
    %333 = vmatpush1.xpose.msra.mxu0 0.0
    %334 = vmatprep.subr.mxu0 0.0
    %335 = vmatpush1.xpose.msra.mxu0 0.0
    %336 = vmatprep.subr.mxu0 0.0
    %337 = vmatpush1.xpose.msra.mxu0 0.0
    %338 = vmatprep.subr.mxu0 0.0
    %339 = vmatpush1.xpose.msra.mxu0 0.0
    %340 = vmatprep.subr.mxu0 0.0
    %341 = vmatpush1.xpose.msra.mxu0 0.0
    %v342 = vand.u32 %v21, 4294901760
    %343 = vmatprep.subr.mxu0 %v342
    %v344 = vand.u32 %v20, 4294901760
    %345 = vmatpush1.xpose.msra.mxu0 %v344
    %v346 = vand.u32 %v17, 4294901760
    %347 = vmatprep.subr.mxu0 %v346
    %v348 = vand.u32 %v16, 4294901760
    %349 = vmatpush1.xpose.msra.mxu0 %v348
    %350 = vmatprep.subr.mxu0 0.0
    %351 = vmatpush2.xpose.msra.mxu0 0.0
    %352 = vmatprep.subr.mxu0 0.0
    %353 = vmatpush2.xpose.msra.mxu0 0.0
    %354 = vmatprep.subr.mxu0 0.0
    %355 = vmatpush2.xpose.msra.mxu0 0.0
    %356 = vmatprep.subr.mxu0 0.0
    %357 = vmatpush2.xpose.msra.mxu0 0.0
    %358 = vmatprep.subr.mxu0 0.0
    %359 = vmatpush2.xpose.msra.mxu0 0.0
    %360 = vmatprep.subr.mxu0 0.0
    %361 = vmatpush2.xpose.msra.mxu0 0.0
    %362 = vmatprep.subr.mxu0 0.0
    %363 = vmatpush2.xpose.msra.mxu0 0.0
    %364 = vmatprep.subr.mxu0 0.0
    %365 = vmatpush2.xpose.msra.mxu0 0.0
    %366 = vmatprep.subr.mxu0 0.0
    %367 = vmatpush2.xpose.msra.mxu0 0.0
    %368 = vmatprep.subr.mxu0 0.0
    %369 = vmatpush2.xpose.msra.mxu0 0.0
    %370 = vmatprep.subr.mxu0 0.0
    %371 = vmatpush2.xpose.msra.mxu0 0.0
    %372 = vmatprep.subr.mxu0 0.0
    %373 = vmatpush2.xpose.msra.mxu0 0.0
    %374 = vmatprep.subr.mxu0 0.0
    %375 = vmatpush2.xpose.msra.mxu0 0.0
    %376 = vmatprep.subr.mxu0 0.0
    %377 = vmatpush2.xpose.msra.mxu0 0.0
    %378 = vmatprep.subr.mxu0 0.0
    %379 = vmatpush2.xpose.msra.mxu0 0.0
    %380 = vmatprep.subr.mxu0 0.0
    %381 = vmatpush2.xpose.msra.mxu0 0.0
    %v382 = vand.u32 %v35, 4294901760
    %v383 = vsub.f32 %v35, %v382
    %v384 = vand.u32 %v383, 4294901760
    %385 = vmatprep.mubr.f32.mxu0 %v384
    %v386 = vand.u32 %v31, 4294901760
    %v387 = vsub.f32 %v31, %v386
    %v388 = vand.u32 %v387, 4294901760
    %389 = vmatmul.mubr.f32.gmra.mxu0 %v388
    %v390 = vpop.f32.mrf.mxu0
    %v391 = vadd.f32 %v311, %v390
    %v392 = vpop.f32.mrf.mxu0
    %393 = vdwg.mxu0
    %394 = vmatprep.subr.mxu0 0.0
    %395 = vmatpush1.xpose.msra.mxu0 0.0
    %396 = vmatprep.subr.mxu0 0.0
    %397 = vmatpush1.xpose.msra.mxu0 0.0
    %398 = vmatprep.subr.mxu0 0.0
    %399 = vmatpush1.xpose.msra.mxu0 0.0
    %400 = vmatprep.subr.mxu0 0.0
    %401 = vmatpush1.xpose.msra.mxu0 0.0
    %402 = vmatprep.subr.mxu0 0.0
    %403 = vmatpush1.xpose.msra.mxu0 0.0
    %404 = vmatprep.subr.mxu0 0.0
    %405 = vmatpush1.xpose.msra.mxu0 0.0
    %406 = vmatprep.subr.mxu0 0.0
    %407 = vmatpush1.xpose.msra.mxu0 0.0
    %408 = vmatprep.subr.mxu0 0.0
    %409 = vmatpush1.xpose.msra.mxu0 0.0
    %410 = vmatprep.subr.mxu0 0.0
    %411 = vmatpush1.xpose.msra.mxu0 0.0
    %412 = vmatprep.subr.mxu0 0.0
    %413 = vmatpush1.xpose.msra.mxu0 0.0
    %414 = vmatprep.subr.mxu0 0.0
    %415 = vmatpush1.xpose.msra.mxu0 0.0
    %416 = vmatprep.subr.mxu0 0.0
    %417 = vmatpush1.xpose.msra.mxu0 0.0
    %418 = vmatprep.subr.mxu0 0.0
    %419 = vmatpush1.xpose.msra.mxu0 0.0
    %420 = vmatprep.subr.mxu0 0.0
    %421 = vmatpush1.xpose.msra.mxu0 0.0
    %v422 = vand.u32 %v21, 4294901760
    %v423 = vsub.f32 %v21, %v422
    %v424 = vand.u32 %v423, 4294901760
    %425 = vmatprep.subr.mxu0 %v424
    %v426 = vand.u32 %v20, 4294901760
    %v427 = vsub.f32 %v20, %v426
    %v428 = vand.u32 %v427, 4294901760
    %429 = vmatpush1.xpose.msra.mxu0 %v428
    %v430 = vand.u32 %v17, 4294901760
    %v431 = vsub.f32 %v17, %v430
    %v432 = vand.u32 %v431, 4294901760
    %433 = vmatprep.subr.mxu0 %v432
    %v434 = vand.u32 %v16, 4294901760
    %v435 = vsub.f32 %v16, %v434
    %v436 = vand.u32 %v435, 4294901760
    %437 = vmatpush1.xpose.msra.mxu0 %v436
    %438 = vmatprep.subr.mxu0 0.0
    %439 = vmatpush2.xpose.msra.mxu0 0.0
    %440 = vmatprep.subr.mxu0 0.0
    %441 = vmatpush2.xpose.msra.mxu0 0.0
    %442 = vmatprep.subr.mxu0 0.0
    %443 = vmatpush2.xpose.msra.mxu0 0.0
    %444 = vmatprep.subr.mxu0 0.0
    %445 = vmatpush2.xpose.msra.mxu0 0.0
    %446 = vmatprep.subr.mxu0 0.0
    %447 = vmatpush2.xpose.msra.mxu0 0.0
    %448 = vmatprep.subr.mxu0 0.0
    %449 = vmatpush2.xpose.msra.mxu0 0.0
    %450 = vmatprep.subr.mxu0 0.0
    %451 = vmatpush2.xpose.msra.mxu0 0.0
    %452 = vmatprep.subr.mxu0 0.0
    %453 = vmatpush2.xpose.msra.mxu0 0.0
    %454 = vmatprep.subr.mxu0 0.0
    %455 = vmatpush2.xpose.msra.mxu0 0.0
    %456 = vmatprep.subr.mxu0 0.0
    %457 = vmatpush2.xpose.msra.mxu0 0.0
    %458 = vmatprep.subr.mxu0 0.0
    %459 = vmatpush2.xpose.msra.mxu0 0.0
    %460 = vmatprep.subr.mxu0 0.0
    %461 = vmatpush2.xpose.msra.mxu0 0.0
    %462 = vmatprep.subr.mxu0 0.0
    %463 = vmatpush2.xpose.msra.mxu0 0.0
    %464 = vmatprep.subr.mxu0 0.0
    %465 = vmatpush2.xpose.msra.mxu0 0.0
    %466 = vmatprep.subr.mxu0 0.0
    %467 = vmatpush2.xpose.msra.mxu0 0.0
    %468 = vmatprep.subr.mxu0 0.0
    %469 = vmatpush2.xpose.msra.mxu0 0.0
    %v470 = vand.u32 %v35, 4294901760
    %471 = vmatprep.mubr.f32.mxu0 %v470
    %v472 = vand.u32 %v31, 4294901760
    %473 = vmatmul.mubr.f32.gmra.mxu0 %v472
    %v474 = vpop.f32.mrf.mxu0
    %v475 = vadd.f32 %v391, %v474
    %v476 = vpop.f32.mrf.mxu0
    %477 = vdwg.mxu0
    %478 = vmatprep.subr.mxu0 0.0
    %479 = vmatpush1.xpose.msra.mxu0 0.0
    %480 = vmatprep.subr.mxu0 0.0
    %481 = vmatpush1.xpose.msra.mxu0 0.0
    %482 = vmatprep.subr.mxu0 0.0
    %483 = vmatpush1.xpose.msra.mxu0 0.0
    %484 = vmatprep.subr.mxu0 0.0
    %485 = vmatpush1.xpose.msra.mxu0 0.0
    %486 = vmatprep.subr.mxu0 0.0
    %487 = vmatpush1.xpose.msra.mxu0 0.0
    %488 = vmatprep.subr.mxu0 0.0
    %489 = vmatpush1.xpose.msra.mxu0 0.0
    %490 = vmatprep.subr.mxu0 0.0
    %491 = vmatpush1.xpose.msra.mxu0 0.0
    %492 = vmatprep.subr.mxu0 0.0
    %493 = vmatpush1.xpose.msra.mxu0 0.0
    %494 = vmatprep.subr.mxu0 0.0
    %495 = vmatpush1.xpose.msra.mxu0 0.0
    %496 = vmatprep.subr.mxu0 0.0
    %497 = vmatpush1.xpose.msra.mxu0 0.0
    %498 = vmatprep.subr.mxu0 0.0
    %499 = vmatpush1.xpose.msra.mxu0 0.0
    %500 = vmatprep.subr.mxu0 0.0
    %501 = vmatpush1.xpose.msra.mxu0 0.0
    %502 = vmatprep.subr.mxu0 0.0
    %503 = vmatpush1.xpose.msra.mxu0 0.0
    %504 = vmatprep.subr.mxu0 0.0
    %505 = vmatpush1.xpose.msra.mxu0 0.0
    %v506 = vand.u32 %v21, 4294901760
    %507 = vmatprep.subr.mxu0 %v506
    %v508 = vand.u32 %v20, 4294901760
    %509 = vmatpush1.xpose.msra.mxu0 %v508
    %v510 = vand.u32 %v17, 4294901760
    %511 = vmatprep.subr.mxu0 %v510
    %v512 = vand.u32 %v16, 4294901760
    %513 = vmatpush1.xpose.msra.mxu0 %v512
    %514 = vmatprep.subr.mxu0 0.0
    %515 = vmatpush2.xpose.msra.mxu0 0.0
    %516 = vmatprep.subr.mxu0 0.0
    %517 = vmatpush2.xpose.msra.mxu0 0.0
    %518 = vmatprep.subr.mxu0 0.0
    %519 = vmatpush2.xpose.msra.mxu0 0.0
    %520 = vmatprep.subr.mxu0 0.0
    %521 = vmatpush2.xpose.msra.mxu0 0.0
    %522 = vmatprep.subr.mxu0 0.0
    %523 = vmatpush2.xpose.msra.mxu0 0.0
    %524 = vmatprep.subr.mxu0 0.0
    %525 = vmatpush2.xpose.msra.mxu0 0.0
    %526 = vmatprep.subr.mxu0 0.0
    %527 = vmatpush2.xpose.msra.mxu0 0.0
    %528 = vmatprep.subr.mxu0 0.0
    %529 = vmatpush2.xpose.msra.mxu0 0.0
    %530 = vmatprep.subr.mxu0 0.0
    %531 = vmatpush2.xpose.msra.mxu0 0.0
    %532 = vmatprep.subr.mxu0 0.0
    %533 = vmatpush2.xpose.msra.mxu0 0.0
    %534 = vmatprep.subr.mxu0 0.0
    %535 = vmatpush2.xpose.msra.mxu0 0.0
    %536 = vmatprep.subr.mxu0 0.0
    %537 = vmatpush2.xpose.msra.mxu0 0.0
    %538 = vmatprep.subr.mxu0 0.0
    %539 = vmatpush2.xpose.msra.mxu0 0.0
    %540 = vmatprep.subr.mxu0 0.0
    %541 = vmatpush2.xpose.msra.mxu0 0.0
    %542 = vmatprep.subr.mxu0 0.0
    %543 = vmatpush2.xpose.msra.mxu0 0.0
    %544 = vmatprep.subr.mxu0 0.0
    %545 = vmatpush2.xpose.msra.mxu0 0.0
    %v546 = vand.u32 %v35, 4294901760
    %547 = vmatprep.mubr.f32.mxu0 %v546
    %v548 = vand.u32 %v31, 4294901760
    %549 = vmatmul.mubr.f32.gmra.mxu0 %v548
    %v550 = vpop.f32.mrf.mxu0
    %v551 = vadd.f32 %v475, %v550
    %v552 = vpop.f32.mrf.mxu0
    %553 = vdwg.mxu0
    %554 = vmatprep.subr.mxu0 0.0
    %555 = vmatpush1.xpose.msra.mxu0 0.0
    %556 = vmatprep.subr.mxu0 0.0
    %557 = vmatpush1.xpose.msra.mxu0 0.0
    %558 = vmatprep.subr.mxu0 0.0
    %559 = vmatpush1.xpose.msra.mxu0 0.0
    %560 = vmatprep.subr.mxu0 0.0
    %561 = vmatpush1.xpose.msra.mxu0 0.0
    %562 = vmatprep.subr.mxu0 0.0
    %563 = vmatpush1.xpose.msra.mxu0 0.0
    %564 = vmatprep.subr.mxu0 0.0
    %565 = vmatpush1.xpose.msra.mxu0 0.0
    %566 = vmatprep.subr.mxu0 0.0
    %567 = vmatpush1.xpose.msra.mxu0 0.0
    %568 = vmatprep.subr.mxu0 0.0
    %569 = vmatpush1.xpose.msra.mxu0 0.0
    %570 = vmatprep.subr.mxu0 0.0
    %571 = vmatpush1.xpose.msra.mxu0 0.0
    %572 = vmatprep.subr.mxu0 0.0
    %573 = vmatpush1.xpose.msra.mxu0 0.0
    %574 = vmatprep.subr.mxu0 0.0
    %575 = vmatpush1.xpose.msra.mxu0 0.0
    %576 = vmatprep.subr.mxu0 0.0
    %577 = vmatpush1.xpose.msra.mxu0 0.0
    %578 = vmatprep.subr.mxu0 0.0
    %579 = vmatpush1.xpose.msra.mxu0 0.0
    %580 = vmatprep.subr.mxu0 0.0
    %581 = vmatpush1.xpose.msra.mxu0 0.0
    %v582 = vand.u32 %v54, 4294901760
    %583 = vmatprep.subr.mxu0 %v582
    %v584 = vand.u32 %v22, 4294901760
    %585 = vmatpush1.xpose.msra.mxu0 %v584
    %v586 = vand.u32 %v51, 4294901760
    %587 = vmatprep.subr.mxu0 %v586
    %v588 = vand.u32 %v18, 4294901760
    %589 = vmatpush1.xpose.msra.mxu0 %v588
    %590 = vmatprep.subr.mxu0 0.0
    %591 = vmatpush2.xpose.msra.mxu0 0.0
    %592 = vmatprep.subr.mxu0 0.0
    %593 = vmatpush2.xpose.msra.mxu0 0.0
    %594 = vmatprep.subr.mxu0 0.0
    %595 = vmatpush2.xpose.msra.mxu0 0.0
    %596 = vmatprep.subr.mxu0 0.0
    %597 = vmatpush2.xpose.msra.mxu0 0.0
    %598 = vmatprep.subr.mxu0 0.0
    %599 = vmatpush2.xpose.msra.mxu0 0.0
    %600 = vmatprep.subr.mxu0 0.0
    %601 = vmatpush2.xpose.msra.mxu0 0.0
    %602 = vmatprep.subr.mxu0 0.0
    %603 = vmatpush2.xpose.msra.mxu0 0.0
    %604 = vmatprep.subr.mxu0 0.0
    %605 = vmatpush2.xpose.msra.mxu0 0.0
    %606 = vmatprep.subr.mxu0 0.0
    %607 = vmatpush2.xpose.msra.mxu0 0.0
    %608 = vmatprep.subr.mxu0 0.0
    %609 = vmatpush2.xpose.msra.mxu0 0.0
    %610 = vmatprep.subr.mxu0 0.0
    %611 = vmatpush2.xpose.msra.mxu0 0.0
    %612 = vmatprep.subr.mxu0 0.0
    %613 = vmatpush2.xpose.msra.mxu0 0.0
    %614 = vmatprep.subr.mxu0 0.0
    %615 = vmatpush2.xpose.msra.mxu0 0.0
    %616 = vmatprep.subr.mxu0 0.0
    %617 = vmatpush2.xpose.msra.mxu0 0.0
    %618 = vmatprep.subr.mxu0 0.0
    %619 = vmatpush2.xpose.msra.mxu0 0.0
    %620 = vmatprep.subr.mxu0 0.0
    %621 = vmatpush2.xpose.msra.mxu0 0.0
    %v622 = vand.u32 %v48, 4294901760
    %v623 = vsub.f32 %v48, %v622
    %v624 = vand.u32 %v623, 4294901760
    %v625 = vsub.f32 %v623, %v624
    %v626 = vand.u32 %v625, 4294901760
    %627 = vmatprep.mubr.f32.mxu0 %v626
    %v628 = vand.u32 %v39, 4294901760
    %v629 = vsub.f32 %v39, %v628
    %v630 = vand.u32 %v629, 4294901760
    %v631 = vsub.f32 %v629, %v630
    %v632 = vand.u32 %v631, 4294901760
    %633 = vmatmul.mubr.f32.gmra.mxu0 %v632
    %v634 = vpop.f32.mrf.mxu0
    %v635 = vadd.f32 %v551, %v634
    %v636 = vpop.f32.mrf.mxu0
    %637 = vdwg.mxu0
    %638 = vmatprep.subr.mxu0 0.0
    %639 = vmatpush1.xpose.msra.mxu0 0.0
    %640 = vmatprep.subr.mxu0 0.0
    %641 = vmatpush1.xpose.msra.mxu0 0.0
    %642 = vmatprep.subr.mxu0 0.0
    %643 = vmatpush1.xpose.msra.mxu0 0.0
    %644 = vmatprep.subr.mxu0 0.0
    %645 = vmatpush1.xpose.msra.mxu0 0.0
    %646 = vmatprep.subr.mxu0 0.0
    %647 = vmatpush1.xpose.msra.mxu0 0.0
    %648 = vmatprep.subr.mxu0 0.0
    %649 = vmatpush1.xpose.msra.mxu0 0.0
    %650 = vmatprep.subr.mxu0 0.0
    %651 = vmatpush1.xpose.msra.mxu0 0.0
    %652 = vmatprep.subr.mxu0 0.0
    %653 = vmatpush1.xpose.msra.mxu0 0.0
    %654 = vmatprep.subr.mxu0 0.0
    %655 = vmatpush1.xpose.msra.mxu0 0.0
    %656 = vmatprep.subr.mxu0 0.0
    %657 = vmatpush1.xpose.msra.mxu0 0.0
    %658 = vmatprep.subr.mxu0 0.0
    %659 = vmatpush1.xpose.msra.mxu0 0.0
    %660 = vmatprep.subr.mxu0 0.0
    %661 = vmatpush1.xpose.msra.mxu0 0.0
    %662 = vmatprep.subr.mxu0 0.0
    %663 = vmatpush1.xpose.msra.mxu0 0.0
    %664 = vmatprep.subr.mxu0 0.0
    %665 = vmatpush1.xpose.msra.mxu0 0.0
    %v666 = vand.u32 %v54, 4294901760
    %v667 = vsub.f32 %v54, %v666
    %v668 = vand.u32 %v667, 4294901760
    %v669 = vsub.f32 %v667, %v668
    %v670 = vand.u32 %v669, 4294901760
    %671 = vmatprep.subr.mxu0 %v670
    %v672 = vand.u32 %v22, 4294901760
    %v673 = vsub.f32 %v22, %v672
    %v674 = vand.u32 %v673, 4294901760
    %v675 = vsub.f32 %v673, %v674
    %v676 = vand.u32 %v675, 4294901760
    %677 = vmatpush1.xpose.msra.mxu0 %v676
    %v678 = vand.u32 %v51, 4294901760
    %v679 = vsub.f32 %v51, %v678
    %v680 = vand.u32 %v679, 4294901760
    %v681 = vsub.f32 %v679, %v680
    %v682 = vand.u32 %v681, 4294901760
    %683 = vmatprep.subr.mxu0 %v682
    %v684 = vand.u32 %v18, 4294901760
    %v685 = vsub.f32 %v18, %v684
    %v686 = vand.u32 %v685, 4294901760
    %v687 = vsub.f32 %v685, %v686
    %v688 = vand.u32 %v687, 4294901760
    %689 = vmatpush1.xpose.msra.mxu0 %v688
    %690 = vmatprep.subr.mxu0 0.0
    %691 = vmatpush2.xpose.msra.mxu0 0.0
    %692 = vmatprep.subr.mxu0 0.0
    %693 = vmatpush2.xpose.msra.mxu0 0.0
    %694 = vmatprep.subr.mxu0 0.0
    %695 = vmatpush2.xpose.msra.mxu0 0.0
    %696 = vmatprep.subr.mxu0 0.0
    %697 = vmatpush2.xpose.msra.mxu0 0.0
    %698 = vmatprep.subr.mxu0 0.0
    %699 = vmatpush2.xpose.msra.mxu0 0.0
    %700 = vmatprep.subr.mxu0 0.0
    %701 = vmatpush2.xpose.msra.mxu0 0.0
    %702 = vmatprep.subr.mxu0 0.0
    %703 = vmatpush2.xpose.msra.mxu0 0.0
    %704 = vmatprep.subr.mxu0 0.0
    %705 = vmatpush2.xpose.msra.mxu0 0.0
    %706 = vmatprep.subr.mxu0 0.0
    %707 = vmatpush2.xpose.msra.mxu0 0.0
    %708 = vmatprep.subr.mxu0 0.0
    %709 = vmatpush2.xpose.msra.mxu0 0.0
    %710 = vmatprep.subr.mxu0 0.0
    %711 = vmatpush2.xpose.msra.mxu0 0.0
    %712 = vmatprep.subr.mxu0 0.0
    %713 = vmatpush2.xpose.msra.mxu0 0.0
    %714 = vmatprep.subr.mxu0 0.0
    %715 = vmatpush2.xpose.msra.mxu0 0.0
    %716 = vmatprep.subr.mxu0 0.0
    %717 = vmatpush2.xpose.msra.mxu0 0.0
    %718 = vmatprep.subr.mxu0 0.0
    %719 = vmatpush2.xpose.msra.mxu0 0.0
    %720 = vmatprep.subr.mxu0 0.0
    %721 = vmatpush2.xpose.msra.mxu0 0.0
    %v722 = vand.u32 %v48, 4294901760
    %723 = vmatprep.mubr.f32.mxu0 %v722
    %v724 = vand.u32 %v39, 4294901760
    %725 = vmatmul.mubr.f32.gmra.mxu0 %v724
    %v726 = vpop.f32.mrf.mxu0
    %v727 = vadd.f32 %v635, %v726
    %v728 = vpop.f32.mrf.mxu0
    %729 = vdwg.mxu0
    %730 = vmatprep.subr.mxu0 0.0
    %731 = vmatpush1.xpose.msra.mxu0 0.0
    %732 = vmatprep.subr.mxu0 0.0
    %733 = vmatpush1.xpose.msra.mxu0 0.0
    %734 = vmatprep.subr.mxu0 0.0
    %735 = vmatpush1.xpose.msra.mxu0 0.0
    %736 = vmatprep.subr.mxu0 0.0
    %737 = vmatpush1.xpose.msra.mxu0 0.0
    %738 = vmatprep.subr.mxu0 0.0
    %739 = vmatpush1.xpose.msra.mxu0 0.0
    %740 = vmatprep.subr.mxu0 0.0
    %741 = vmatpush1.xpose.msra.mxu0 0.0
    %742 = vmatprep.subr.mxu0 0.0
    %743 = vmatpush1.xpose.msra.mxu0 0.0
    %744 = vmatprep.subr.mxu0 0.0
    %745 = vmatpush1.xpose.msra.mxu0 0.0
    %746 = vmatprep.subr.mxu0 0.0
    %747 = vmatpush1.xpose.msra.mxu0 0.0
    %748 = vmatprep.subr.mxu0 0.0
    %749 = vmatpush1.xpose.msra.mxu0 0.0
    %750 = vmatprep.subr.mxu0 0.0
    %751 = vmatpush1.xpose.msra.mxu0 0.0
    %752 = vmatprep.subr.mxu0 0.0
    %753 = vmatpush1.xpose.msra.mxu0 0.0
    %754 = vmatprep.subr.mxu0 0.0
    %755 = vmatpush1.xpose.msra.mxu0 0.0
    %756 = vmatprep.subr.mxu0 0.0
    %757 = vmatpush1.xpose.msra.mxu0 0.0
    %v758 = vand.u32 %v54, 4294901760
    %v759 = vsub.f32 %v54, %v758
    %760 = vmatprep.subr.mxu0 %v759
    %v761 = vand.u32 %v22, 4294901760
    %v762 = vsub.f32 %v22, %v761
    %763 = vmatpush1.xpose.msra.mxu0 %v762
    %v764 = vand.u32 %v51, 4294901760
    %v765 = vsub.f32 %v51, %v764
    %766 = vmatprep.subr.mxu0 %v765
    %v767 = vand.u32 %v18, 4294901760
    %v768 = vsub.f32 %v18, %v767
    %769 = vmatpush1.xpose.msra.mxu0 %v768
    %770 = vmatprep.subr.mxu0 0.0
    %771 = vmatpush2.xpose.msra.mxu0 0.0
    %772 = vmatprep.subr.mxu0 0.0
    %773 = vmatpush2.xpose.msra.mxu0 0.0
    %774 = vmatprep.subr.mxu0 0.0
    %775 = vmatpush2.xpose.msra.mxu0 0.0
    %776 = vmatprep.subr.mxu0 0.0
    %777 = vmatpush2.xpose.msra.mxu0 0.0
    %778 = vmatprep.subr.mxu0 0.0
    %779 = vmatpush2.xpose.msra.mxu0 0.0
    %780 = vmatprep.subr.mxu0 0.0
    %781 = vmatpush2.xpose.msra.mxu0 0.0
    %782 = vmatprep.subr.mxu0 0.0
    %783 = vmatpush2.xpose.msra.mxu0 0.0
    %784 = vmatprep.subr.mxu0 0.0
    %785 = vmatpush2.xpose.msra.mxu0 0.0
    %786 = vmatprep.subr.mxu0 0.0
    %787 = vmatpush2.xpose.msra.mxu0 0.0
    %788 = vmatprep.subr.mxu0 0.0
    %789 = vmatpush2.xpose.msra.mxu0 0.0
    %790 = vmatprep.subr.mxu0 0.0
    %791 = vmatpush2.xpose.msra.mxu0 0.0
    %792 = vmatprep.subr.mxu0 0.0
    %793 = vmatpush2.xpose.msra.mxu0 0.0
    %794 = vmatprep.subr.mxu0 0.0
    %795 = vmatpush2.xpose.msra.mxu0 0.0
    %796 = vmatprep.subr.mxu0 0.0
    %797 = vmatpush2.xpose.msra.mxu0 0.0
    %798 = vmatprep.subr.mxu0 0.0
    %799 = vmatpush2.xpose.msra.mxu0 0.0
    %800 = vmatprep.subr.mxu0 0.0
    %801 = vmatpush2.xpose.msra.mxu0 0.0
    %v802 = vand.u32 %v48, 4294901760
    %v803 = vsub.f32 %v48, %v802
    %804 = vmatprep.mubr.f32.mxu0 %v803
    %v805 = vand.u32 %v39, 4294901760
    %v806 = vsub.f32 %v39, %v805
    %807 = vmatmul.mubr.f32.gmra.mxu0 %v806
    %v808 = vpop.f32.mrf.mxu0
    %v809 = vadd.f32 %v727, %v808
    %v810 = vpop.f32.mrf.mxu0
    %811 = vdwg.mxu0
    %812 = vmatprep.subr.mxu0 0.0
    %813 = vmatpush1.xpose.msra.mxu0 0.0
    %814 = vmatprep.subr.mxu0 0.0
    %815 = vmatpush1.xpose.msra.mxu0 0.0
    %816 = vmatprep.subr.mxu0 0.0
    %817 = vmatpush1.xpose.msra.mxu0 0.0
    %818 = vmatprep.subr.mxu0 0.0
    %819 = vmatpush1.xpose.msra.mxu0 0.0
    %820 = vmatprep.subr.mxu0 0.0
    %821 = vmatpush1.xpose.msra.mxu0 0.0
    %822 = vmatprep.subr.mxu0 0.0
    %823 = vmatpush1.xpose.msra.mxu0 0.0
    %824 = vmatprep.subr.mxu0 0.0
    %825 = vmatpush1.xpose.msra.mxu0 0.0
    %826 = vmatprep.subr.mxu0 0.0
    %827 = vmatpush1.xpose.msra.mxu0 0.0
    %828 = vmatprep.subr.mxu0 0.0
    %829 = vmatpush1.xpose.msra.mxu0 0.0
    %830 = vmatprep.subr.mxu0 0.0
    %831 = vmatpush1.xpose.msra.mxu0 0.0
    %832 = vmatprep.subr.mxu0 0.0
    %833 = vmatpush1.xpose.msra.mxu0 0.0
    %834 = vmatprep.subr.mxu0 0.0
    %835 = vmatpush1.xpose.msra.mxu0 0.0
    %836 = vmatprep.subr.mxu0 0.0
    %837 = vmatpush1.xpose.msra.mxu0 0.0
    %838 = vmatprep.subr.mxu0 0.0
    %839 = vmatpush1.xpose.msra.mxu0 0.0
    %v840 = vand.u32 %v54, 4294901760
    %841 = vmatprep.subr.mxu0 %v840
    %v842 = vand.u32 %v22, 4294901760
    %843 = vmatpush1.xpose.msra.mxu0 %v842
    %v844 = vand.u32 %v51, 4294901760
    %845 = vmatprep.subr.mxu0 %v844
    %v846 = vand.u32 %v18, 4294901760
    %847 = vmatpush1.xpose.msra.mxu0 %v846
    %848 = vmatprep.subr.mxu0 0.0
    %849 = vmatpush2.xpose.msra.mxu0 0.0
    %850 = vmatprep.subr.mxu0 0.0
    %851 = vmatpush2.xpose.msra.mxu0 0.0
    %852 = vmatprep.subr.mxu0 0.0
    %853 = vmatpush2.xpose.msra.mxu0 0.0
    %854 = vmatprep.subr.mxu0 0.0
    %855 = vmatpush2.xpose.msra.mxu0 0.0
    %856 = vmatprep.subr.mxu0 0.0
    %857 = vmatpush2.xpose.msra.mxu0 0.0
    %858 = vmatprep.subr.mxu0 0.0
    %859 = vmatpush2.xpose.msra.mxu0 0.0
    %860 = vmatprep.subr.mxu0 0.0
    %861 = vmatpush2.xpose.msra.mxu0 0.0
    %862 = vmatprep.subr.mxu0 0.0
    %863 = vmatpush2.xpose.msra.mxu0 0.0
    %864 = vmatprep.subr.mxu0 0.0
    %865 = vmatpush2.xpose.msra.mxu0 0.0
    %866 = vmatprep.subr.mxu0 0.0
    %867 = vmatpush2.xpose.msra.mxu0 0.0
    %868 = vmatprep.subr.mxu0 0.0
    %869 = vmatpush2.xpose.msra.mxu0 0.0
    %870 = vmatprep.subr.mxu0 0.0
    %871 = vmatpush2.xpose.msra.mxu0 0.0
    %872 = vmatprep.subr.mxu0 0.0
    %873 = vmatpush2.xpose.msra.mxu0 0.0
    %874 = vmatprep.subr.mxu0 0.0
    %875 = vmatpush2.xpose.msra.mxu0 0.0
    %876 = vmatprep.subr.mxu0 0.0
    %877 = vmatpush2.xpose.msra.mxu0 0.0
    %878 = vmatprep.subr.mxu0 0.0
    %879 = vmatpush2.xpose.msra.mxu0 0.0
    %v880 = vand.u32 %v48, 4294901760
    %v881 = vsub.f32 %v48, %v880
    %v882 = vand.u32 %v881, 4294901760
    %883 = vmatprep.mubr.f32.mxu0 %v882
    %v884 = vand.u32 %v39, 4294901760
    %v885 = vsub.f32 %v39, %v884
    %v886 = vand.u32 %v885, 4294901760
    %887 = vmatmul.mubr.f32.gmra.mxu0 %v886
    %v888 = vpop.f32.mrf.mxu0
    %v889 = vadd.f32 %v809, %v888
    %v890 = vpop.f32.mrf.mxu0
    %891 = vdwg.mxu0
    %892 = vmatprep.subr.mxu0 0.0
    %893 = vmatpush1.xpose.msra.mxu0 0.0
    %894 = vmatprep.subr.mxu0 0.0
    %895 = vmatpush1.xpose.msra.mxu0 0.0
    %896 = vmatprep.subr.mxu0 0.0
    %897 = vmatpush1.xpose.msra.mxu0 0.0
    %898 = vmatprep.subr.mxu0 0.0
    %899 = vmatpush1.xpose.msra.mxu0 0.0
    %900 = vmatprep.subr.mxu0 0.0
    %901 = vmatpush1.xpose.msra.mxu0 0.0
    %902 = vmatprep.subr.mxu0 0.0
    %903 = vmatpush1.xpose.msra.mxu0 0.0
    %904 = vmatprep.subr.mxu0 0.0
    %905 = vmatpush1.xpose.msra.mxu0 0.0
    %906 = vmatprep.subr.mxu0 0.0
    %907 = vmatpush1.xpose.msra.mxu0 0.0
    %908 = vmatprep.subr.mxu0 0.0
    %909 = vmatpush1.xpose.msra.mxu0 0.0
    %910 = vmatprep.subr.mxu0 0.0
    %911 = vmatpush1.xpose.msra.mxu0 0.0
    %912 = vmatprep.subr.mxu0 0.0
    %913 = vmatpush1.xpose.msra.mxu0 0.0
    %914 = vmatprep.subr.mxu0 0.0
    %915 = vmatpush1.xpose.msra.mxu0 0.0
    %916 = vmatprep.subr.mxu0 0.0
    %917 = vmatpush1.xpose.msra.mxu0 0.0
    %918 = vmatprep.subr.mxu0 0.0
    %919 = vmatpush1.xpose.msra.mxu0 0.0
    %v920 = vand.u32 %v54, 4294901760
    %v921 = vsub.f32 %v54, %v920
    %v922 = vand.u32 %v921, 4294901760
    %923 = vmatprep.subr.mxu0 %v922
    %v924 = vand.u32 %v22, 4294901760
    %v925 = vsub.f32 %v22, %v924
    %v926 = vand.u32 %v925, 4294901760
    %927 = vmatpush1.xpose.msra.mxu0 %v926
    %v928 = vand.u32 %v51, 4294901760
    %v929 = vsub.f32 %v51, %v928
    %v930 = vand.u32 %v929, 4294901760
    %931 = vmatprep.subr.mxu0 %v930
    %v932 = vand.u32 %v18, 4294901760
    %v933 = vsub.f32 %v18, %v932
    %v934 = vand.u32 %v933, 4294901760
    %935 = vmatpush1.xpose.msra.mxu0 %v934
    %936 = vmatprep.subr.mxu0 0.0
    %937 = vmatpush2.xpose.msra.mxu0 0.0
    %938 = vmatprep.subr.mxu0 0.0
    %939 = vmatpush2.xpose.msra.mxu0 0.0
    %940 = vmatprep.subr.mxu0 0.0
    %941 = vmatpush2.xpose.msra.mxu0 0.0
    %942 = vmatprep.subr.mxu0 0.0
    %943 = vmatpush2.xpose.msra.mxu0 0.0
    %944 = vmatprep.subr.mxu0 0.0
    %945 = vmatpush2.xpose.msra.mxu0 0.0
    %946 = vmatprep.subr.mxu0 0.0
    %947 = vmatpush2.xpose.msra.mxu0 0.0
    %948 = vmatprep.subr.mxu0 0.0
    %949 = vmatpush2.xpose.msra.mxu0 0.0
    %950 = vmatprep.subr.mxu0 0.0
    %951 = vmatpush2.xpose.msra.mxu0 0.0
    %952 = vmatprep.subr.mxu0 0.0
    %953 = vmatpush2.xpose.msra.mxu0 0.0
    %954 = vmatprep.subr.mxu0 0.0
    %955 = vmatpush2.xpose.msra.mxu0 0.0
    %956 = vmatprep.subr.mxu0 0.0
    %957 = vmatpush2.xpose.msra.mxu0 0.0
    %958 = vmatprep.subr.mxu0 0.0
    %959 = vmatpush2.xpose.msra.mxu0 0.0
    %960 = vmatprep.subr.mxu0 0.0
    %961 = vmatpush2.xpose.msra.mxu0 0.0
    %962 = vmatprep.subr.mxu0 0.0
    %963 = vmatpush2.xpose.msra.mxu0 0.0
    %964 = vmatprep.subr.mxu0 0.0
    %965 = vmatpush2.xpose.msra.mxu0 0.0
    %966 = vmatprep.subr.mxu0 0.0
    %967 = vmatpush2.xpose.msra.mxu0 0.0
    %v968 = vand.u32 %v48, 4294901760
    %969 = vmatprep.mubr.f32.mxu0 %v968
    %v970 = vand.u32 %v39, 4294901760
    %971 = vmatmul.mubr.f32.gmra.mxu0 %v970
    %v972 = vpop.f32.mrf.mxu0
    %v973 = vadd.f32 %v889, %v972
    %v974 = vpop.f32.mrf.mxu0
    %975 = vdwg.mxu0
    %976 = vmatprep.subr.mxu0 0.0
    %977 = vmatpush1.xpose.msra.mxu0 0.0
    %978 = vmatprep.subr.mxu0 0.0
    %979 = vmatpush1.xpose.msra.mxu0 0.0
    %980 = vmatprep.subr.mxu0 0.0
    %981 = vmatpush1.xpose.msra.mxu0 0.0
    %982 = vmatprep.subr.mxu0 0.0
    %983 = vmatpush1.xpose.msra.mxu0 0.0
    %984 = vmatprep.subr.mxu0 0.0
    %985 = vmatpush1.xpose.msra.mxu0 0.0
    %986 = vmatprep.subr.mxu0 0.0
    %987 = vmatpush1.xpose.msra.mxu0 0.0
    %988 = vmatprep.subr.mxu0 0.0
    %989 = vmatpush1.xpose.msra.mxu0 0.0
    %990 = vmatprep.subr.mxu0 0.0
    %991 = vmatpush1.xpose.msra.mxu0 0.0
    %992 = vmatprep.subr.mxu0 0.0
    %993 = vmatpush1.xpose.msra.mxu0 0.0
    %994 = vmatprep.subr.mxu0 0.0
    %995 = vmatpush1.xpose.msra.mxu0 0.0
    %996 = vmatprep.subr.mxu0 0.0
    %997 = vmatpush1.xpose.msra.mxu0 0.0
    %998 = vmatprep.subr.mxu0 0.0
    %999 = vmatpush1.xpose.msra.mxu0 0.0
    %1000 = vmatprep.subr.mxu0 0.0
    %1001 = vmatpush1.xpose.msra.mxu0 0.0
    %1002 = vmatprep.subr.mxu0 0.0
    %1003 = vmatpush1.xpose.msra.mxu0 0.0
    %v1004 = vand.u32 %v54, 4294901760
    %1005 = vmatprep.subr.mxu0 %v1004
    %v1006 = vand.u32 %v22, 4294901760
    %1007 = vmatpush1.xpose.msra.mxu0 %v1006
    %v1008 = vand.u32 %v51, 4294901760
    %1009 = vmatprep.subr.mxu0 %v1008
    %v1010 = vand.u32 %v18, 4294901760
    %1011 = vmatpush1.xpose.msra.mxu0 %v1010
    %1012 = vmatprep.subr.mxu0 0.0
    %1013 = vmatpush2.xpose.msra.mxu0 0.0
    %1014 = vmatprep.subr.mxu0 0.0
    %1015 = vmatpush2.xpose.msra.mxu0 0.0
    %1016 = vmatprep.subr.mxu0 0.0
    %1017 = vmatpush2.xpose.msra.mxu0 0.0
    %1018 = vmatprep.subr.mxu0 0.0
    %1019 = vmatpush2.xpose.msra.mxu0 0.0
    %1020 = vmatprep.subr.mxu0 0.0
    %1021 = vmatpush2.xpose.msra.mxu0 0.0
    %1022 = vmatprep.subr.mxu0 0.0
    %1023 = vmatpush2.xpose.msra.mxu0 0.0
    %1024 = vmatprep.subr.mxu0 0.0
    %1025 = vmatpush2.xpose.msra.mxu0 0.0
    %1026 = vmatprep.subr.mxu0 0.0
    %1027 = vmatpush2.xpose.msra.mxu0 0.0
    %1028 = vmatprep.subr.mxu0 0.0
    %1029 = vmatpush2.xpose.msra.mxu0 0.0
    %1030 = vmatprep.subr.mxu0 0.0
    %1031 = vmatpush2.xpose.msra.mxu0 0.0
    %1032 = vmatprep.subr.mxu0 0.0
    %1033 = vmatpush2.xpose.msra.mxu0 0.0
    %1034 = vmatprep.subr.mxu0 0.0
    %1035 = vmatpush2.xpose.msra.mxu0 0.0
    %1036 = vmatprep.subr.mxu0 0.0
    %1037 = vmatpush2.xpose.msra.mxu0 0.0
    %1038 = vmatprep.subr.mxu0 0.0
    %1039 = vmatpush2.xpose.msra.mxu0 0.0
    %1040 = vmatprep.subr.mxu0 0.0
    %1041 = vmatpush2.xpose.msra.mxu0 0.0
    %1042 = vmatprep.subr.mxu0 0.0
    %1043 = vmatpush2.xpose.msra.mxu0 0.0
    %v1044 = vand.u32 %v48, 4294901760
    %1045 = vmatprep.mubr.f32.mxu0 %v1044
    %v1046 = vand.u32 %v39, 4294901760
    %1047 = vmatmul.mubr.f32.gmra.mxu0 %v1046
    %v1048 = vpop.f32.mrf.mxu0
    %v1049 = vadd.f32 %v973, %v1048
    %v1050 = vpop.f32.mrf.mxu0
    %1051 = vdwg.mxu0
    %vm1052 = vcmask 122880
    %1053 = vst.msk [vmem:[#allocation3] sm:$0x1] %vm1052, %v1049
    // Predicated region
    $region14: #{forward.1} parent=1 // pred_check
      _
    $region15: #{forward.1} parent=1 // pred_check_branch
      %1055 = sbr.rel (0) target = $region17
    $region16: #{forward.1} parent=1 // pred_region
      %s1057 = ssub.s32 16, 16
      %1058 = vsyncadd [#allocation4], %s1057
      %s1060 = sshll.u32 [#allocation3], 4
      %s1061 = int_to_ptr.vmem [resolvable:$true] %s1060
      %1063 = dma.vmem_to_hbm [thread:$0]  %s1061, 16, %s3, [#allocation4]
    $region17: #{forward.1} parent=1 // pred_fallthru
      _
    // Predicated region
    $region18: #{forward.1} parent=1 // pred_check
      _
    $region19: #{forward.1} parent=1 // pred_check_branch
      %1065 = sbr.rel (0) target = $region21
    $region20: #{forward.1} parent=1 // pred_region
      %1066 = dma.done [#allocation4], 16
    $region21: #{forward.1} parent=1 // pred_fallthru
      _
    %1067 = vsyncpa [#allocation4], 1

</llo_original>
